<compile_context>
chip_gen: v7x
topology: tpu7x:2x2x1
jax: 0.10.0
libtpu: 0.0.40
codegen_flags: <defaults>
</compile_context>

<pallas_src>
import functools

import jax
import jax.numpy as jnp
from jax.experimental import pallas as pl
from jax.experimental.pallas import tpu as pltpu

_LANES = 128
_MAX_TILE_ROWS = 1024  # 1024 x 128 x 4 B = 512 KiB per input block


def _floordiv(x, d, xf=None):
    """floor(x / d) for non-negative int32 x and positive Python-int d.

    Reciprocal-multiply float32 estimate plus a single combined +-1 integer
    correction (the estimate is within +-1 for every (x, d) pair used here),
    avoiding vector integer division. `xf` optionally supplies a pre-converted
    float32 copy of x so shared dividends are converted only once.
    """
    if xf is None:
        xf = x.astype(jnp.float32)
    q = (xf * jnp.float32(1.0 / d)).astype(jnp.int32)  # trunc == floor (x >= 0)
    r = x - q * jnp.int32(d)
    return q + (r >= jnp.int32(d)).astype(jnp.int32) - (r < 0).astype(jnp.int32)


def _civil_from_ts(ts):
    """Per-element UTC calendar split of non-negative int32 unix seconds.

    Returns (year - 1970, month, day, weekday) with datetime.weekday()
    convention (Monday == 0). Howard Hinnant's civil_from_days algorithm.
    """
    # days since epoch: ts // 86400 == (ts >> 7) // 675   (86400 = 128 * 675);
    # the shift keeps the dividend < 2**24 so the float estimate stays exact.
    days = _floordiv(jnp.right_shift(ts, 7), 675)

    z = days + 719468
    era = _floordiv(z, 146097)
    doe = z - era * 146097                                    # [0, 146096]
    doe_f = doe.astype(jnp.float32)                           # convert once
    yoe = _floordiv(
        doe
        - _floordiv(doe, 1460, doe_f)
        + _floordiv(doe, 36524, doe_f)
        - (doe == jnp.int32(146096)).astype(jnp.int32),       # doe//146096
        365,
    )                                                         # [0, 399]
    y = yoe + era * 400
    # yoe // 4 == yoe >> 2 (yoe >= 0): one shift instead of a full floordiv.
    doy = doe - (365 * yoe + jnp.right_shift(yoe, 2) - _floordiv(yoe, 100))
    mp = _floordiv(5 * doy + 2, 153)                          # [0, 11]
    day = doy - _floordiv(153 * mp + 2, 5) + 1                # [1, 31]
    month = mp + jnp.where(mp < 10, 3, -9)                    # [1, 12]
    year_rel = y + (month <= 2).astype(jnp.int32) - 1970

    # datetime.weekday(): Monday == 0; 1970-01-01 was a Thursday (== 3).
    wd = days + 3
    weekday = wd - 7 * _floordiv(wd, 7)
    return year_rel, month, day, weekday


def _time_block_kernel(ts_ref, out_ref,
                       sum_y, sum_m, sum_d, sum_w, max_ts, min_ts,
                       *, n, tile_r, total):
    pid = pl.program_id(0)
    last = pl.num_programs(0) - 1

    # ---- init accumulators (and the resident output block) ------------------
    @pl.when(pid == 0)
    def _init():
        zeros = jnp.zeros((tile_r, _LANES), jnp.int32)
        sum_y[...] = zeros
        sum_m[...] = zeros
        sum_d[...] = zeros
        sum_w[...] = zeros
        max_ts[...] = jnp.full((tile_r, _LANES), jnp.iinfo(jnp.int32).min, jnp.int32)
        min_ts[...] = jnp.full((tile_r, _LANES), jnp.iinfo(jnp.int32).max, jnp.int32)
        out_ref[...] = jnp.zeros((1, _LANES), jnp.int32)

    # ---- steady state: pure elementwise VALU work on a (tile_r, 128) block --
    ts = ts_ref[...]
    year_rel, month, day, weekday = _civil_from_ts(ts)

    def _accumulate(mask):
        if mask is None:
            yr, mo, dy, wd = year_rel, month, day, weekday
        else:
            yr, mo, dy, wd = (year_rel * mask, month * mask,
                              day * mask, weekday * mask)
        sum_y[...] += yr
        sum_m[...] += mo
        sum_d[...] += dy
        sum_w[...] += wd

    # Padding (replica of the last real timestamp) lives entirely in the last
    # tile, so only that tile pays for the validity mask.
    last_valid = n - (total - tile_r * _LANES)  # Python int: valid elems in last tile
    if last_valid == tile_r * _LANES:
        _accumulate(None)
    else:
        @pl.when(pid != last)
        def _plain():
            _accumulate(None)

        @pl.when(pid == last)
        def _masked():
            row = jax.lax.broadcasted_iota(jnp.int32, (tile_r, _LANES), 0)
            lane = jax.lax.broadcasted_iota(jnp.int32, (tile_r, _LANES), 1)
            _accumulate(((row * _LANES + lane) < last_valid).astype(jnp.int32))

    # Padding replicates a real timestamp, so max/min need no mask.
    max_ts[...] = jnp.maximum(max_ts[...], ts)
    min_ts[...] = jnp.minimum(min_ts[...], ts)

    # ---- finalize: one cross-lane reduction + scalar math, last step only ---
    @pl.when(pid == last)
    def _finalize():
        # Truncated averages (all values >= 0 so trunc == floor).
        avg_year = _floordiv(jnp.sum(sum_y[...]), n) + 1970
        avg_month = _floordiv(jnp.sum(sum_m[...]), n)
        avg_day = _floordiv(jnp.sum(sum_d[...]), n)
        avg_weekday = _floordiv(jnp.sum(sum_w[...]), n)

        # Collection duration in whole days: (latest - earliest).days
        diff = jnp.max(max_ts[...]) - jnp.min(min_ts[...])
        duration = _floordiv(jnp.right_shift(diff, 7), 675)

        lane = jax.lax.broadcasted_iota(jnp.int32, (1, _LANES), 1)
        out = jnp.where(lane == 0, avg_year,
              jnp.where(lane == 1, avg_month,
              jnp.where(lane == 2, avg_day,
              jnp.where(lane == 3, avg_weekday,
              jnp.where(lane == 4, duration, 0)))))
        out_ref[...] = out.astype(jnp.int32)


def time_block_forward(timestamps):
    """JAX/Pallas equivalent of TimeBlock.forward.

    Args:
      timestamps: 1-D array-like of unix timestamps (seconds).
    Returns:
      int32 array of shape (5,):
        [avg_year, avg_month, avg_day, avg_weekday, collection_duration_days]
      (PyTorch returns int64; int32 is used here since values are small.)
    """
    ts = jnp.asarray(timestamps, dtype=jnp.int32).reshape(-1)
    n = int(ts.shape[0])

    # Lane/sublane-dense repack: (rows, 128) with rows a multiple of 8 and of
    # the row tile, so every int32 vreg carries 1024 useful elements.
    rows = max(1, -(-n // _LANES))
    rows = -(-rows // 8) * 8
    tile_r = min(_MAX_TILE_ROWS, rows)
    rows = -(-rows // tile_r) * tile_r
    total = rows * _LANES
    num_tiles = rows // tile_r

    if total > n:
        # Pad with a replica of the last real timestamp (keeps max/min exact;
        # sums are masked inside the kernel's last tile).
        ts = jnp.concatenate([ts, jnp.full((total - n,), ts[n - 1], jnp.int32)])
    ts2d = ts.reshape(rows, _LANES)

    kernel = functools.partial(_time_block_kernel, n=n, tile_r=tile_r, total=total)
    out = pl.pallas_call(
        kernel,
        out_shape=jax.ShapeDtypeStruct((1, _LANES), jnp.int32),
        grid=(num_tiles,),
        in_specs=[pl.BlockSpec((tile_r, _LANES), lambda i: (i, 0))],
        out_specs=pl.BlockSpec((1, _LANES), lambda i: (0, 0)),
        scratch_shapes=[pltpu.VMEM((tile_r, _LANES), jnp.int32)] * 6,
        compiler_params=pltpu.CompilerParams(
            dimension_semantics=("arbitrary",)),
        cost_estimate=pl.CostEstimate(
            flops=115 * total, transcendentals=0,
            bytes_accessed=4 * total + 4 * _LANES),
    )(ts2d)
    return out[0, :5]


if __name__ == "__main__":
    key = jax.random.PRNGKey(0)
    # 8 deterministic timestamps within ~90 days of 2020-09-13 (1.6e9 s).
    base = jnp.int32(1_600_000_000)
    offsets = jax.random.randint(key, (8,), 0, 90 * 86400, dtype=jnp.int32)
    timestamps = base + offsets

    result = time_block_forward(timestamps)
    jax.block_until_ready(result)
    print("KERNEL_OK")
</pallas_src>

<mosaic_0001>
module attributes {stable_mosaic.version = 11 : i64} {
  func.func @_time_block_kernel(%arg0: i32, %arg1: memref<8x128xi32, #tpu.memory_space<vmem>>, %arg2: memref<1x128xi32, #tpu.memory_space<vmem>>, %arg3: memref<8x128xi32, #tpu.memory_space<vmem>>, %arg4: memref<8x128xi32, #tpu.memory_space<vmem>>, %arg5: memref<8x128xi32, #tpu.memory_space<vmem>>, %arg6: memref<8x128xi32, #tpu.memory_space<vmem>>, %arg7: memref<8x128xi32, #tpu.memory_space<vmem>>, %arg8: memref<8x128xi32, #tpu.memory_space<vmem>>) attributes {dimension_semantics = [#tpu.dimension_semantics<arbitrary>], iteration_bounds = array<i64: 1>, scalar_prefetch = 0 : i64, scratch_operands = 6 : i64, tpu.core_type = #tpu.core_type<tc>, window_params = [{transform_indices = @transform_0, window_bounds = array<i64: 8, 128>}, {pipeline_mode = #tpu.pipeline_mode<synchronous>, transform_indices = @transform_1, window_bounds = array<i64: 1, 128>}]} {
    %c0_i32 = arith.constant 0 : i32
    %0 = arith.cmpi eq, %arg0, %c0_i32 : i32
    %1 = arith.extui %0 : i1 to i32
    %c0_i32_0 = arith.constant 0 : i32
    %2 = arith.cmpi ne, %1, %c0_i32_0 : i32
    scf.if %2 {
      %c0_i32_52 = arith.constant 0 : i32
      %204 = vector.broadcast %c0_i32_52 : i32 to vector<8x128xi32>
      %c0_53 = arith.constant 0 : index
      %c0_54 = arith.constant 0 : index
      %205 = vector.load %arg3[%c0_53, %c0_54] : memref<8x128xi32, #tpu.memory_space<vmem>>, vector<8x128xi32>
      tpu.vector_store %arg3[%c0_53, %c0_54], %204 {strides = array<i32>} : memref<8x128xi32, #tpu.memory_space<vmem>>, vector<8x128xi32>,
      %c0_55 = arith.constant 0 : index
      %c0_56 = arith.constant 0 : index
      %206 = vector.load %arg4[%c0_55, %c0_56] : memref<8x128xi32, #tpu.memory_space<vmem>>, vector<8x128xi32>
      tpu.vector_store %arg4[%c0_55, %c0_56], %204 {strides = array<i32>} : memref<8x128xi32, #tpu.memory_space<vmem>>, vector<8x128xi32>,
      %c0_57 = arith.constant 0 : index
      %c0_58 = arith.constant 0 : index
      %207 = vector.load %arg5[%c0_57, %c0_58] : memref<8x128xi32, #tpu.memory_space<vmem>>, vector<8x128xi32>
      tpu.vector_store %arg5[%c0_57, %c0_58], %204 {strides = array<i32>} : memref<8x128xi32, #tpu.memory_space<vmem>>, vector<8x128xi32>,
      %c0_59 = arith.constant 0 : index
      %c0_60 = arith.constant 0 : index
      %208 = vector.load %arg6[%c0_59, %c0_60] : memref<8x128xi32, #tpu.memory_space<vmem>>, vector<8x128xi32>
      tpu.vector_store %arg6[%c0_59, %c0_60], %204 {strides = array<i32>} : memref<8x128xi32, #tpu.memory_space<vmem>>, vector<8x128xi32>,
      %c-2147483648_i32 = arith.constant -2147483648 : i32
      %209 = vector.broadcast %c-2147483648_i32 : i32 to vector<8x128xi32>
      %c0_61 = arith.constant 0 : index
      %c0_62 = arith.constant 0 : index
      %210 = vector.load %arg7[%c0_61, %c0_62] : memref<8x128xi32, #tpu.memory_space<vmem>>, vector<8x128xi32>
      tpu.vector_store %arg7[%c0_61, %c0_62], %209 {strides = array<i32>} : memref<8x128xi32, #tpu.memory_space<vmem>>, vector<8x128xi32>,
      %c2147483647_i32 = arith.constant 2147483647 : i32
      %211 = vector.broadcast %c2147483647_i32 : i32 to vector<8x128xi32>
      %c0_63 = arith.constant 0 : index
      %c0_64 = arith.constant 0 : index
      %212 = vector.load %arg8[%c0_63, %c0_64] : memref<8x128xi32, #tpu.memory_space<vmem>>, vector<8x128xi32>
      tpu.vector_store %arg8[%c0_63, %c0_64], %211 {strides = array<i32>} : memref<8x128xi32, #tpu.memory_space<vmem>>, vector<8x128xi32>,
      %c0_i32_65 = arith.constant 0 : i32
      %213 = vector.broadcast %c0_i32_65 : i32 to vector<1x128xi32>
      %c0_66 = arith.constant 0 : index
      %c0_67 = arith.constant 0 : index
      %214 = vector.load %arg2[%c0_66, %c0_67] : memref<1x128xi32, #tpu.memory_space<vmem>>, vector<1x128xi32>
      tpu.vector_store %arg2[%c0_66, %c0_67], %213 {strides = array<i32>} : memref<1x128xi32, #tpu.memory_space<vmem>>, vector<1x128xi32>,
    } else {
    }
    %c0 = arith.constant 0 : index
    %c0_1 = arith.constant 0 : index
    %3 = vector.load %arg1[%c0, %c0_1] : memref<8x128xi32, #tpu.memory_space<vmem>>, vector<8x128xi32>
    %c7_i32 = arith.constant 7 : i32
    %4 = vector.broadcast %c7_i32 : i32 to vector<8x128xi32>
    %5 = arith.shrsi %3, %4 : vector<8x128xi32>
    %6 = arith.sitofp %5 : vector<8x128xi32> to vector<8x128xf32>
    %cst = arith.constant 0.00148148148 : f32
    %7 = vector.broadcast %cst : f32 to vector<8x128xf32>
    %8 = arith.mulf %6, %7 : vector<8x128xf32>
    %9 = arith.fptosi %8 : vector<8x128xf32> to vector<8x128xi32>
    %c675_i32 = arith.constant 675 : i32
    %10 = vector.broadcast %c675_i32 : i32 to vector<8x128xi32>
    %11 = arith.muli %9, %10 : vector<8x128xi32>
    %12 = arith.subi %5, %11 : vector<8x128xi32>
    %c675_i32_2 = arith.constant 675 : i32
    %13 = vector.broadcast %c675_i32_2 : i32 to vector<8x128xi32>
    %14 = arith.cmpi sge, %12, %13 : vector<8x128xi32>
    %15 = arith.extui %14 : vector<8x128xi1> to vector<8x128xi32>
    %16 = arith.addi %9, %15 : vector<8x128xi32>
    %c0_i32_3 = arith.constant 0 : i32
    %17 = vector.broadcast %c0_i32_3 : i32 to vector<8x128xi32>
    %18 = arith.cmpi slt, %12, %17 : vector<8x128xi32>
    %19 = arith.extui %18 : vector<8x128xi1> to vector<8x128xi32>
    %20 = arith.subi %16, %19 : vector<8x128xi32>
    %c719468_i32 = arith.constant 719468 : i32
    %21 = vector.broadcast %c719468_i32 : i32 to vector<8x128xi32>
    %22 = arith.addi %20, %21 : vector<8x128xi32>
    %23 = arith.sitofp %22 : vector<8x128xi32> to vector<8x128xf32>
    %cst_4 = arith.constant 6.84476754E-6 : f32
    %24 = vector.broadcast %cst_4 : f32 to vector<8x128xf32>
    %25 = arith.mulf %23, %24 : vector<8x128xf32>
    %26 = arith.fptosi %25 : vector<8x128xf32> to vector<8x128xi32>
    %c146097_i32 = arith.constant 146097 : i32
    %27 = vector.broadcast %c146097_i32 : i32 to vector<8x128xi32>
    %28 = arith.muli %26, %27 : vector<8x128xi32>
    %29 = arith.subi %22, %28 : vector<8x128xi32>
    %c146097_i32_5 = arith.constant 146097 : i32
    %30 = vector.broadcast %c146097_i32_5 : i32 to vector<8x128xi32>
    %31 = arith.cmpi sge, %29, %30 : vector<8x128xi32>
    %32 = arith.extui %31 : vector<8x128xi1> to vector<8x128xi32>
    %33 = arith.addi %26, %32 : vector<8x128xi32>
    %c0_i32_6 = arith.constant 0 : i32
    %34 = vector.broadcast %c0_i32_6 : i32 to vector<8x128xi32>
    %35 = arith.cmpi slt, %29, %34 : vector<8x128xi32>
    %36 = arith.extui %35 : vector<8x128xi1> to vector<8x128xi32>
    %37 = arith.subi %33, %36 : vector<8x128xi32>
    %c146097_i32_7 = arith.constant 146097 : i32
    %38 = vector.broadcast %c146097_i32_7 : i32 to vector<8x128xi32>
    %39 = arith.muli %37, %38 : vector<8x128xi32>
    %40 = arith.subi %22, %39 : vector<8x128xi32>
    %41 = arith.sitofp %40 : vector<8x128xi32> to vector<8x128xf32>
    %cst_8 = arith.constant 6.84931525E-4 : f32
    %42 = vector.broadcast %cst_8 : f32 to vector<8x128xf32>
    %43 = arith.mulf %41, %42 : vector<8x128xf32>
    %44 = arith.fptosi %43 : vector<8x128xf32> to vector<8x128xi32>
    %c1460_i32 = arith.constant 1460 : i32
    %45 = vector.broadcast %c1460_i32 : i32 to vector<8x128xi32>
    %46 = arith.muli %44, %45 : vector<8x128xi32>
    %47 = arith.subi %40, %46 : vector<8x128xi32>
    %c1460_i32_9 = arith.constant 1460 : i32
    %48 = vector.broadcast %c1460_i32_9 : i32 to vector<8x128xi32>
    %49 = arith.cmpi sge, %47, %48 : vector<8x128xi32>
    %50 = arith.extui %49 : vector<8x128xi1> to vector<8x128xi32>
    %51 = arith.addi %44, %50 : vector<8x128xi32>
    %c0_i32_10 = arith.constant 0 : i32
    %52 = vector.broadcast %c0_i32_10 : i32 to vector<8x128xi32>
    %53 = arith.cmpi slt, %47, %52 : vector<8x128xi32>
    %54 = arith.extui %53 : vector<8x128xi1> to vector<8x128xi32>
    %55 = arith.subi %51, %54 : vector<8x128xi32>
    %56 = arith.subi %40, %55 : vector<8x128xi32>
    %cst_11 = arith.constant 2.73792575E-5 : f32
    %57 = vector.broadcast %cst_11 : f32 to vector<8x128xf32>
    %58 = arith.mulf %41, %57 : vector<8x128xf32>
    %59 = arith.fptosi %58 : vector<8x128xf32> to vector<8x128xi32>
    %c36524_i32 = arith.constant 36524 : i32
    %60 = vector.broadcast %c36524_i32 : i32 to vector<8x128xi32>
    %61 = arith.muli %59, %60 : vector<8x128xi32>
    %62 = arith.subi %40, %61 : vector<8x128xi32>
    %c36524_i32_12 = arith.constant 36524 : i32
    %63 = vector.broadcast %c36524_i32_12 : i32 to vector<8x128xi32>
    %64 = arith.cmpi sge, %62, %63 : vector<8x128xi32>
    %65 = arith.extui %64 : vector<8x128xi1> to vector<8x128xi32>
    %66 = arith.addi %59, %65 : vector<8x128xi32>
    %c0_i32_13 = arith.constant 0 : i32
    %67 = vector.broadcast %c0_i32_13 : i32 to vector<8x128xi32>
    %68 = arith.cmpi slt, %62, %67 : vector<8x128xi32>
    %69 = arith.extui %68 : vector<8x128xi1> to vector<8x128xi32>
    %70 = arith.subi %66, %69 : vector<8x128xi32>
    %71 = arith.addi %56, %70 : vector<8x128xi32>
    %c146096_i32 = arith.constant 146096 : i32
    %72 = vector.broadcast %c146096_i32 : i32 to vector<8x128xi32>
    %73 = arith.cmpi eq, %40, %72 : vector<8x128xi32>
    %74 = arith.extui %73 : vector<8x128xi1> to vector<8x128xi32>
    %75 = arith.subi %71, %74 : vector<8x128xi32>
    %76 = arith.sitofp %75 : vector<8x128xi32> to vector<8x128xf32>
    %cst_14 = arith.constant 0.0027397261 : f32
    %77 = vector.broadcast %cst_14 : f32 to vector<8x128xf32>
    %78 = arith.mulf %76, %77 : vector<8x128xf32>
    %79 = arith.fptosi %78 : vector<8x128xf32> to vector<8x128xi32>
    %c365_i32 = arith.constant 365 : i32
    %80 = vector.broadcast %c365_i32 : i32 to vector<8x128xi32>
    %81 = arith.muli %79, %80 : vector<8x128xi32>
    %82 = arith.subi %75, %81 : vector<8x128xi32>
    %c365_i32_15 = arith.constant 365 : i32
    %83 = vector.broadcast %c365_i32_15 : i32 to vector<8x128xi32>
    %84 = arith.cmpi sge, %82, %83 : vector<8x128xi32>
    %85 = arith.extui %84 : vector<8x128xi1> to vector<8x128xi32>
    %86 = arith.addi %79, %85 : vector<8x128xi32>
    %c0_i32_16 = arith.constant 0 : i32
    %87 = vector.broadcast %c0_i32_16 : i32 to vector<8x128xi32>
    %88 = arith.cmpi slt, %82, %87 : vector<8x128xi32>
    %89 = arith.extui %88 : vector<8x128xi1> to vector<8x128xi32>
    %90 = arith.subi %86, %89 : vector<8x128xi32>
    %c400_i32 = arith.constant 400 : i32
    %91 = vector.broadcast %c400_i32 : i32 to vector<8x128xi32>
    %92 = arith.muli %37, %91 : vector<8x128xi32>
    %93 = arith.addi %90, %92 : vector<8x128xi32>
    %c365_i32_17 = arith.constant 365 : i32
    %94 = vector.broadcast %c365_i32_17 : i32 to vector<8x128xi32>
    %95 = arith.muli %94, %90 : vector<8x128xi32>
    %c2_i32 = arith.constant 2 : i32
    %96 = vector.broadcast %c2_i32 : i32 to vector<8x128xi32>
    %97 = arith.shrsi %90, %96 : vector<8x128xi32>
    %98 = arith.addi %95, %97 : vector<8x128xi32>
    %99 = arith.sitofp %90 : vector<8x128xi32> to vector<8x128xf32>
    %cst_18 = arith.constant 0.00999999977 : f32
    %100 = vector.broadcast %cst_18 : f32 to vector<8x128xf32>
    %101 = arith.mulf %99, %100 : vector<8x128xf32>
    %102 = arith.fptosi %101 : vector<8x128xf32> to vector<8x128xi32>
    %c100_i32 = arith.constant 100 : i32
    %103 = vector.broadcast %c100_i32 : i32 to vector<8x128xi32>
    %104 = arith.muli %102, %103 : vector<8x128xi32>
    %105 = arith.subi %90, %104 : vector<8x128xi32>
    %c100_i32_19 = arith.constant 100 : i32
    %106 = vector.broadcast %c100_i32_19 : i32 to vector<8x128xi32>
    %107 = arith.cmpi sge, %105, %106 : vector<8x128xi32>
    %108 = arith.extui %107 : vector<8x128xi1> to vector<8x128xi32>
    %109 = arith.addi %102, %108 : vector<8x128xi32>
    %c0_i32_20 = arith.constant 0 : i32
    %110 = vector.broadcast %c0_i32_20 : i32 to vector<8x128xi32>
    %111 = arith.cmpi slt, %105, %110 : vector<8x128xi32>
    %112 = arith.extui %111 : vector<8x128xi1> to vector<8x128xi32>
    %113 = arith.subi %109, %112 : vector<8x128xi32>
    %114 = arith.subi %98, %113 : vector<8x128xi32>
    %115 = arith.subi %40, %114 : vector<8x128xi32>
    %c5_i32 = arith.constant 5 : i32
    %116 = vector.broadcast %c5_i32 : i32 to vector<8x128xi32>
    %117 = arith.muli %116, %115 : vector<8x128xi32>
    %c2_i32_21 = arith.constant 2 : i32
    %118 = vector.broadcast %c2_i32_21 : i32 to vector<8x128xi32>
    %119 = arith.addi %117, %118 : vector<8x128xi32>
    %120 = arith.sitofp %119 : vector<8x128xi32> to vector<8x128xf32>
    %cst_22 = arith.constant 0.00653594779 : f32
    %121 = vector.broadcast %cst_22 : f32 to vector<8x128xf32>
    %122 = arith.mulf %120, %121 : vector<8x128xf32>
    %123 = arith.fptosi %122 : vector<8x128xf32> to vector<8x128xi32>
    %c153_i32 = arith.constant 153 : i32
    %124 = vector.broadcast %c153_i32 : i32 to vector<8x128xi32>
    %125 = arith.muli %123, %124 : vector<8x128xi32>
    %126 = arith.subi %119, %125 : vector<8x128xi32>
    %c153_i32_23 = arith.constant 153 : i32
    %127 = vector.broadcast %c153_i32_23 : i32 to vector<8x128xi32>
    %128 = arith.cmpi sge, %126, %127 : vector<8x128xi32>
    %129 = arith.extui %128 : vector<8x128xi1> to vector<8x128xi32>
    %130 = arith.addi %123, %129 : vector<8x128xi32>
    %c0_i32_24 = arith.constant 0 : i32
    %131 = vector.broadcast %c0_i32_24 : i32 to vector<8x128xi32>
    %132 = arith.cmpi slt, %126, %131 : vector<8x128xi32>
    %133 = arith.extui %132 : vector<8x128xi1> to vector<8x128xi32>
    %134 = arith.subi %130, %133 : vector<8x128xi32>
    %c153_i32_25 = arith.constant 153 : i32
    %135 = vector.broadcast %c153_i32_25 : i32 to vector<8x128xi32>
    %136 = arith.muli %135, %134 : vector<8x128xi32>
    %c2_i32_26 = arith.constant 2 : i32
    %137 = vector.broadcast %c2_i32_26 : i32 to vector<8x128xi32>
    %138 = arith.addi %136, %137 : vector<8x128xi32>
    %139 = arith.sitofp %138 : vector<8x128xi32> to vector<8x128xf32>
    %cst_27 = arith.constant 2.000000e-01 : f32
    %140 = vector.broadcast %cst_27 : f32 to vector<8x128xf32>
    %141 = arith.mulf %139, %140 : vector<8x128xf32>
    %142 = arith.fptosi %141 : vector<8x128xf32> to vector<8x128xi32>
    %c5_i32_28 = arith.constant 5 : i32
    %143 = vector.broadcast %c5_i32_28 : i32 to vector<8x128xi32>
    %144 = arith.muli %142, %143 : vector<8x128xi32>
    %145 = arith.subi %138, %144 : vector<8x128xi32>
    %c5_i32_29 = arith.constant 5 : i32
    %146 = vector.broadcast %c5_i32_29 : i32 to vector<8x128xi32>
    %147 = arith.cmpi sge, %145, %146 : vector<8x128xi32>
    %148 = arith.extui %147 : vector<8x128xi1> to vector<8x128xi32>
    %149 = arith.addi %142, %148 : vector<8x128xi32>
    %c0_i32_30 = arith.constant 0 : i32
    %150 = vector.broadcast %c0_i32_30 : i32 to vector<8x128xi32>
    %151 = arith.cmpi slt, %145, %150 : vector<8x128xi32>
    %152 = arith.extui %151 : vector<8x128xi1> to vector<8x128xi32>
    %153 = arith.subi %149, %152 : vector<8x128xi32>
    %154 = arith.subi %115, %153 : vector<8x128xi32>
    %c1_i32 = arith.constant 1 : i32
    %155 = vector.broadcast %c1_i32 : i32 to vector<8x128xi32>
    %156 = arith.addi %154, %155 : vector<8x128xi32>
    %c10_i32 = arith.constant 10 : i32
    %157 = vector.broadcast %c10_i32 : i32 to vector<8x128xi32>
    %158 = arith.cmpi slt, %134, %157 : vector<8x128xi32>
    %c3_i32 = arith.constant 3 : i32
    %c-9_i32 = arith.constant -9 : i32
    %159 = vector.broadcast %c3_i32 : i32 to vector<8x128xi32>
    %160 = vector.broadcast %c-9_i32 : i32 to vector<8x128xi32>
    %161 = arith.select %158, %159, %160 : vector<8x128xi1>, vector<8x128xi32>
    %162 = arith.addi %134, %161 : vector<8x128xi32>
    %c2_i32_31 = arith.constant 2 : i32
    %163 = vector.broadcast %c2_i32_31 : i32 to vector<8x128xi32>
    %164 = arith.cmpi sle, %162, %163 : vector<8x128xi32>
    %165 = arith.extui %164 : vector<8x128xi1> to vector<8x128xi32>
    %166 = arith.addi %93, %165 : vector<8x128xi32>
    %c1970_i32 = arith.constant 1970 : i32
    %167 = vector.broadcast %c1970_i32 : i32 to vector<8x128xi32>
    %168 = arith.subi %166, %167 : vector<8x128xi32>
    %c3_i32_32 = arith.constant 3 : i32
    %169 = vector.broadcast %c3_i32_32 : i32 to vector<8x128xi32>
    %170 = arith.addi %20, %169 : vector<8x128xi32>
    %171 = arith.sitofp %170 : vector<8x128xi32> to vector<8x128xf32>
    %cst_33 = arith.constant 0.142857149 : f32
    %172 = vector.broadcast %cst_33 : f32 to vector<8x128xf32>
    %173 = arith.mulf %171, %172 : vector<8x128xf32>
    %174 = arith.fptosi %173 : vector<8x128xf32> to vector<8x128xi32>
    %c7_i32_34 = arith.constant 7 : i32
    %175 = vector.broadcast %c7_i32_34 : i32 to vector<8x128xi32>
    %176 = arith.muli %174, %175 : vector<8x128xi32>
    %177 = arith.subi %170, %176 : vector<8x128xi32>
    %c7_i32_35 = arith.constant 7 : i32
    %178 = vector.broadcast %c7_i32_35 : i32 to vector<8x128xi32>
    %179 = arith.cmpi sge, %177, %178 : vector<8x128xi32>
    %180 = arith.extui %179 : vector<8x128xi1> to vector<8x128xi32>
    %181 = arith.addi %174, %180 : vector<8x128xi32>
    %c0_i32_36 = arith.constant 0 : i32
    %182 = vector.broadcast %c0_i32_36 : i32 to vector<8x128xi32>
    %183 = arith.cmpi slt, %177, %182 : vector<8x128xi32>
    %184 = arith.extui %183 : vector<8x128xi1> to vector<8x128xi32>
    %185 = arith.subi %181, %184 : vector<8x128xi32>
    %c7_i32_37 = arith.constant 7 : i32
    %186 = vector.broadcast %c7_i32_37 : i32 to vector<8x128xi32>
    %187 = arith.muli %186, %185 : vector<8x128xi32>
    %188 = arith.subi %170, %187 : vector<8x128xi32>
    %c0_i32_38 = arith.constant 0 : i32
    %189 = arith.cmpi ne, %arg0, %c0_i32_38 : i32
    %190 = arith.extui %189 : i1 to i32
    %c0_i32_39 = arith.constant 0 : i32
    %191 = arith.cmpi ne, %190, %c0_i32_39 : i32
    scf.if %191 {
      %c0_52 = arith.constant 0 : index
      %c0_53 = arith.constant 0 : index
      %204 = vector.load %arg3[%c0_52, %c0_53] : memref<8x128xi32, #tpu.memory_space<vmem>>, vector<8x128xi32>
      %205 = arith.addi %204, %168 : vector<8x128xi32>
      %c0_54 = arith.constant 0 : index
      %c0_55 = arith.constant 0 : index
      %206 = vector.load %arg3[%c0_54, %c0_55] : memref<8x128xi32, #tpu.memory_space<vmem>>, vector<8x128xi32>
      tpu.vector_store %arg3[%c0_54, %c0_55], %205 {strides = array<i32>} : memref<8x128xi32, #tpu.memory_space<vmem>>, vector<8x128xi32>,
      %c0_56 = arith.constant 0 : index
      %c0_57 = arith.constant 0 : index
      %207 = vector.load %arg4[%c0_56, %c0_57] : memref<8x128xi32, #tpu.memory_space<vmem>>, vector<8x128xi32>
      %208 = arith.addi %207, %162 : vector<8x128xi32>
      %c0_58 = arith.constant 0 : index
      %c0_59 = arith.constant 0 : index
      %209 = vector.load %arg4[%c0_58, %c0_59] : memref<8x128xi32, #tpu.memory_space<vmem>>, vector<8x128xi32>
      tpu.vector_store %arg4[%c0_58, %c0_59], %208 {strides = array<i32>} : memref<8x128xi32, #tpu.memory_space<vmem>>, vector<8x128xi32>,
      %c0_60 = arith.constant 0 : index
      %c0_61 = arith.constant 0 : index
      %210 = vector.load %arg5[%c0_60, %c0_61] : memref<8x128xi32, #tpu.memory_space<vmem>>, vector<8x128xi32>
      %211 = arith.addi %210, %156 : vector<8x128xi32>
      %c0_62 = arith.constant 0 : index
      %c0_63 = arith.constant 0 : index
      %212 = vector.load %arg5[%c0_62, %c0_63] : memref<8x128xi32, #tpu.memory_space<vmem>>, vector<8x128xi32>
      tpu.vector_store %arg5[%c0_62, %c0_63], %211 {strides = array<i32>} : memref<8x128xi32, #tpu.memory_space<vmem>>, vector<8x128xi32>,
      %c0_64 = arith.constant 0 : index
      %c0_65 = arith.constant 0 : index
      %213 = vector.load %arg6[%c0_64, %c0_65] : memref<8x128xi32, #tpu.memory_space<vmem>>, vector<8x128xi32>
      %214 = arith.addi %213, %188 : vector<8x128xi32>
      %c0_66 = arith.constant 0 : index
      %c0_67 = arith.constant 0 : index
      %215 = vector.load %arg6[%c0_66, %c0_67] : memref<8x128xi32, #tpu.memory_space<vmem>>, vector<8x128xi32>
      tpu.vector_store %arg6[%c0_66, %c0_67], %214 {strides = array<i32>} : memref<8x128xi32, #tpu.memory_space<vmem>>, vector<8x128xi32>,
    } else {
    }
    %c0_i32_40 = arith.constant 0 : i32
    %192 = arith.cmpi eq, %arg0, %c0_i32_40 : i32
    %193 = arith.extui %192 : i1 to i32
    %c0_i32_41 = arith.constant 0 : i32
    %194 = arith.cmpi ne, %193, %c0_i32_41 : i32
    scf.if %194 {
      %204 = tpu.iota {dimensions = array<i32: 0>} : vector<8x128xi32>
      %205 = tpu.iota {dimensions = array<i32: 1>} : vector<8x128xi32>
      %c128_i32 = arith.constant 128 : i32
      %206 = vector.broadcast %c128_i32 : i32 to vector<8x128xi32>
      %207 = arith.muli %204, %206 : vector<8x128xi32>
      %208 = arith.addi %207, %205 : vector<8x128xi32>
      %c8_i32 = arith.constant 8 : i32
      %209 = vector.broadcast %c8_i32 : i32 to vector<8x128xi32>
      %210 = arith.cmpi slt, %208, %209 : vector<8x128xi32>
      %211 = arith.extui %210 : vector<8x128xi1> to vector<8x128xi32>
      %212 = arith.muli %168, %211 : vector<8x128xi32>
      %213 = arith.muli %162, %211 : vector<8x128xi32>
      %214 = arith.muli %156, %211 : vector<8x128xi32>
      %215 = arith.muli %188, %211 : vector<8x128xi32>
      %c0_52 = arith.constant 0 : index
      %c0_53 = arith.constant 0 : index
      %216 = vector.load %arg3[%c0_52, %c0_53] : memref<8x128xi32, #tpu.memory_space<vmem>>, vector<8x128xi32>
      %217 = arith.addi %216, %212 : vector<8x128xi32>
      %c0_54 = arith.constant 0 : index
      %c0_55 = arith.constant 0 : index
      %218 = vector.load %arg3[%c0_54, %c0_55] : memref<8x128xi32, #tpu.memory_space<vmem>>, vector<8x128xi32>
      tpu.vector_store %arg3[%c0_54, %c0_55], %217 {strides = array<i32>} : memref<8x128xi32, #tpu.memory_space<vmem>>, vector<8x128xi32>,
      %c0_56 = arith.constant 0 : index
      %c0_57 = arith.constant 0 : index
      %219 = vector.load %arg4[%c0_56, %c0_57] : memref<8x128xi32, #tpu.memory_space<vmem>>, vector<8x128xi32>
      %220 = arith.addi %219, %213 : vector<8x128xi32>
      %c0_58 = arith.constant 0 : index
      %c0_59 = arith.constant 0 : index
      %221 = vector.load %arg4[%c0_58, %c0_59] : memref<8x128xi32, #tpu.memory_space<vmem>>, vector<8x128xi32>
      tpu.vector_store %arg4[%c0_58, %c0_59], %220 {strides = array<i32>} : memref<8x128xi32, #tpu.memory_space<vmem>>, vector<8x128xi32>,
      %c0_60 = arith.constant 0 : index
      %c0_61 = arith.constant 0 : index
      %222 = vector.load %arg5[%c0_60, %c0_61] : memref<8x128xi32, #tpu.memory_space<vmem>>, vector<8x128xi32>
      %223 = arith.addi %222, %214 : vector<8x128xi32>
      %c0_62 = arith.constant 0 : index
      %c0_63 = arith.constant 0 : index
      %224 = vector.load %arg5[%c0_62, %c0_63] : memref<8x128xi32, #tpu.memory_space<vmem>>, vector<8x128xi32>
      tpu.vector_store %arg5[%c0_62, %c0_63], %223 {strides = array<i32>} : memref<8x128xi32, #tpu.memory_space<vmem>>, vector<8x128xi32>,
      %c0_64 = arith.constant 0 : index
      %c0_65 = arith.constant 0 : index
      %225 = vector.load %arg6[%c0_64, %c0_65] : memref<8x128xi32, #tpu.memory_space<vmem>>, vector<8x128xi32>
      %226 = arith.addi %225, %215 : vector<8x128xi32>
      %c0_66 = arith.constant 0 : index
      %c0_67 = arith.constant 0 : index
      %227 = vector.load %arg6[%c0_66, %c0_67] : memref<8x128xi32, #tpu.memory_space<vmem>>, vector<8x128xi32>
      tpu.vector_store %arg6[%c0_66, %c0_67], %226 {strides = array<i32>} : memref<8x128xi32, #tpu.memory_space<vmem>>, vector<8x128xi32>,
    } else {
    }
    %c0_42 = arith.constant 0 : index
    %c0_43 = arith.constant 0 : index
    %195 = vector.load %arg7[%c0_42, %c0_43] : memref<8x128xi32, #tpu.memory_space<vmem>>, vector<8x128xi32>
    %196 = arith.maxsi %195, %3 : vector<8x128xi32>
    %c0_44 = arith.constant 0 : index
    %c0_45 = arith.constant 0 : index
    %197 = vector.load %arg7[%c0_44, %c0_45] : memref<8x128xi32, #tpu.memory_space<vmem>>, vector<8x128xi32>
    tpu.vector_store %arg7[%c0_44, %c0_45], %196 {strides = array<i32>} : memref<8x128xi32, #tpu.memory_space<vmem>>, vector<8x128xi32>,
    %c0_46 = arith.constant 0 : index
    %c0_47 = arith.constant 0 : index
    %198 = vector.load %arg8[%c0_46, %c0_47] : memref<8x128xi32, #tpu.memory_space<vmem>>, vector<8x128xi32>
    %199 = arith.minsi %198, %3 : vector<8x128xi32>
    %c0_48 = arith.constant 0 : index
    %c0_49 = arith.constant 0 : index
    %200 = vector.load %arg8[%c0_48, %c0_49] : memref<8x128xi32, #tpu.memory_space<vmem>>, vector<8x128xi32>
    tpu.vector_store %arg8[%c0_48, %c0_49], %199 {strides = array<i32>} : memref<8x128xi32, #tpu.memory_space<vmem>>, vector<8x128xi32>,
    %c0_i32_50 = arith.constant 0 : i32
    %201 = arith.cmpi eq, %arg0, %c0_i32_50 : i32
    %202 = arith.extui %201 : i1 to i32
    %c0_i32_51 = arith.constant 0 : i32
    %203 = arith.cmpi ne, %202, %c0_i32_51 : i32
    scf.if %203 {
      %c0_52 = arith.constant 0 : index
      %c0_53 = arith.constant 0 : index
      %204 = vector.load %arg3[%c0_52, %c0_53] : memref<8x128xi32, #tpu.memory_space<vmem>>, vector<8x128xi32>
      %205 = vector.shape_cast %204 : vector<8x128xi32> to vector<1x8x128xi32>
      %cst_54 = arith.constant dense<0> : vector<1xi32>
      %206 = vector.multi_reduction <add>, %205, %cst_54 [1, 2] : vector<1x8x128xi32> to vector<1xi32>
      %207 = vector.shape_cast %206 : vector<1xi32> to vector<1x1x1xi32>
      %208 = vector.extract %207[0, 0, 0] : i32 from vector<1x1x1xi32>
      %209 = arith.sitofp %208 : i32 to f32
      %cst_55 = arith.constant 1.250000e-01 : f32
      %210 = arith.mulf %209, %cst_55 : f32
      %211 = arith.fptosi %210 : f32 to i32
      %c8_i32 = arith.constant 8 : i32
      %212 = arith.muli %211, %c8_i32 : i32
      %213 = arith.subi %208, %212 : i32
      %c8_i32_56 = arith.constant 8 : i32
      %214 = arith.cmpi sge, %213, %c8_i32_56 : i32
      %215 = arith.extui %214 : i1 to i32
      %216 = arith.addi %211, %215 : i32
      %c0_i32_57 = arith.constant 0 : i32
      %217 = arith.cmpi slt, %213, %c0_i32_57 : i32
      %218 = arith.extui %217 : i1 to i32
      %219 = arith.subi %216, %218 : i32
      %c1970_i32_58 = arith.constant 1970 : i32
      %220 = arith.addi %219, %c1970_i32_58 : i32
      %c0_59 = arith.constant 0 : index
      %c0_60 = arith.constant 0 : index
      %221 = vector.load %arg4[%c0_59, %c0_60] : memref<8x128xi32, #tpu.memory_space<vmem>>, vector<8x128xi32>
      %222 = vector.shape_cast %221 : vector<8x128xi32> to vector<1x8x128xi32>
      %cst_61 = arith.constant dense<0> : vector<1xi32>
      %223 = vector.multi_reduction <add>, %222, %cst_61 [1, 2] : vector<1x8x128xi32> to vector<1xi32>
      %224 = vector.shape_cast %223 : vector<1xi32> to vector<1x1x1xi32>
      %225 = vector.extract %224[0, 0, 0] : i32 from vector<1x1x1xi32>
      %226 = arith.sitofp %225 : i32 to f32
      %cst_62 = arith.constant 1.250000e-01 : f32
      %227 = arith.mulf %226, %cst_62 : f32
      %228 = arith.fptosi %227 : f32 to i32
      %c8_i32_63 = arith.constant 8 : i32
      %229 = arith.muli %228, %c8_i32_63 : i32
      %230 = arith.subi %225, %229 : i32
      %c8_i32_64 = arith.constant 8 : i32
      %231 = arith.cmpi sge, %230, %c8_i32_64 : i32
      %232 = arith.extui %231 : i1 to i32
      %233 = arith.addi %228, %232 : i32
      %c0_i32_65 = arith.constant 0 : i32
      %234 = arith.cmpi slt, %230, %c0_i32_65 : i32
      %235 = arith.extui %234 : i1 to i32
      %236 = arith.subi %233, %235 : i32
      %c0_66 = arith.constant 0 : index
      %c0_67 = arith.constant 0 : index
      %237 = vector.load %arg5[%c0_66, %c0_67] : memref<8x128xi32, #tpu.memory_space<vmem>>, vector<8x128xi32>
      %238 = vector.shape_cast %237 : vector<8x128xi32> to vector<1x8x128xi32>
      %cst_68 = arith.constant dense<0> : vector<1xi32>
      %239 = vector.multi_reduction <add>, %238, %cst_68 [1, 2] : vector<1x8x128xi32> to vector<1xi32>
      %240 = vector.shape_cast %239 : vector<1xi32> to vector<1x1x1xi32>
      %241 = vector.extract %240[0, 0, 0] : i32 from vector<1x1x1xi32>
      %242 = arith.sitofp %241 : i32 to f32
      %cst_69 = arith.constant 1.250000e-01 : f32
      %243 = arith.mulf %242, %cst_69 : f32
      %244 = arith.fptosi %243 : f32 to i32
      %c8_i32_70 = arith.constant 8 : i32
      %245 = arith.muli %244, %c8_i32_70 : i32
      %246 = arith.subi %241, %245 : i32
      %c8_i32_71 = arith.constant 8 : i32
      %247 = arith.cmpi sge, %246, %c8_i32_71 : i32
      %248 = arith.extui %247 : i1 to i32
      %249 = arith.addi %244, %248 : i32
      %c0_i32_72 = arith.constant 0 : i32
      %250 = arith.cmpi slt, %246, %c0_i32_72 : i32
      %251 = arith.extui %250 : i1 to i32
      %252 = arith.subi %249, %251 : i32
      %c0_73 = arith.constant 0 : index
      %c0_74 = arith.constant 0 : index
      %253 = vector.load %arg6[%c0_73, %c0_74] : memref<8x128xi32, #tpu.memory_space<vmem>>, vector<8x128xi32>
      %254 = vector.shape_cast %253 : vector<8x128xi32> to vector<1x8x128xi32>
      %cst_75 = arith.constant dense<0> : vector<1xi32>
      %255 = vector.multi_reduction <add>, %254, %cst_75 [1, 2] : vector<1x8x128xi32> to vector<1xi32>
      %256 = vector.shape_cast %255 : vector<1xi32> to vector<1x1x1xi32>
      %257 = vector.extract %256[0, 0, 0] : i32 from vector<1x1x1xi32>
      %258 = arith.sitofp %257 : i32 to f32
      %cst_76 = arith.constant 1.250000e-01 : f32
      %259 = arith.mulf %258, %cst_76 : f32
      %260 = arith.fptosi %259 : f32 to i32
      %c8_i32_77 = arith.constant 8 : i32
      %261 = arith.muli %260, %c8_i32_77 : i32
      %262 = arith.subi %257, %261 : i32
      %c8_i32_78 = arith.constant 8 : i32
      %263 = arith.cmpi sge, %262, %c8_i32_78 : i32
      %264 = arith.extui %263 : i1 to i32
      %265 = arith.addi %260, %264 : i32
      %c0_i32_79 = arith.constant 0 : i32
      %266 = arith.cmpi slt, %262, %c0_i32_79 : i32
      %267 = arith.extui %266 : i1 to i32
      %268 = arith.subi %265, %267 : i32
      %c0_80 = arith.constant 0 : index
      %c0_81 = arith.constant 0 : index
      %269 = vector.load %arg7[%c0_80, %c0_81] : memref<8x128xi32, #tpu.memory_space<vmem>>, vector<8x128xi32>
      %270 = vector.shape_cast %269 : vector<8x128xi32> to vector<1x8x128xi32>
      %cst_82 = arith.constant dense<-2147483648> : vector<1xi32>
      %271 = vector.multi_reduction <maxsi>, %270, %cst_82 [1, 2] : vector<1x8x128xi32> to vector<1xi32>
      %272 = vector.shape_cast %271 : vector<1xi32> to vector<1x1x1xi32>
      %273 = vector.extract %272[0, 0, 0] : i32 from vector<1x1x1xi32>
      %c0_83 = arith.constant 0 : index
      %c0_84 = arith.constant 0 : index
      %274 = vector.load %arg8[%c0_83, %c0_84] : memref<8x128xi32, #tpu.memory_space<vmem>>, vector<8x128xi32>
      %275 = vector.shape_cast %274 : vector<8x128xi32> to vector<1x8x128xi32>
      %cst_85 = arith.constant dense<2147483647> : vector<1xi32>
      %276 = vector.multi_reduction <minsi>, %275, %cst_85 [1, 2] : vector<1x8x128xi32> to vector<1xi32>
      %277 = vector.shape_cast %276 : vector<1xi32> to vector<1x1x1xi32>
      %278 = vector.extract %277[0, 0, 0] : i32 from vector<1x1x1xi32>
      %279 = arith.subi %273, %278 : i32
      %c7_i32_86 = arith.constant 7 : i32
      %280 = arith.shrsi %279, %c7_i32_86 : i32
      %281 = arith.sitofp %280 : i32 to f32
      %cst_87 = arith.constant 0.00148148148 : f32
      %282 = arith.mulf %281, %cst_87 : f32
      %283 = arith.fptosi %282 : f32 to i32
      %c675_i32_88 = arith.constant 675 : i32
      %284 = arith.muli %283, %c675_i32_88 : i32
      %285 = arith.subi %280, %284 : i32
      %c675_i32_89 = arith.constant 675 : i32
      %286 = arith.cmpi sge, %285, %c675_i32_89 : i32
      %287 = arith.extui %286 : i1 to i32
      %288 = arith.addi %283, %287 : i32
      %c0_i32_90 = arith.constant 0 : i32
      %289 = arith.cmpi slt, %285, %c0_i32_90 : i32
      %290 = arith.extui %289 : i1 to i32
      %291 = arith.subi %288, %290 : i32
      %292 = tpu.iota {dimensions = array<i32: 1>} : vector<1x128xi32>
      %c0_i32_91 = arith.constant 0 : i32
      %293 = vector.broadcast %c0_i32_91 : i32 to vector<1x128xi32>
      %294 = arith.cmpi eq, %292, %293 : vector<1x128xi32>
      %c1_i32_92 = arith.constant 1 : i32
      %295 = vector.broadcast %c1_i32_92 : i32 to vector<1x128xi32>
      %296 = arith.cmpi eq, %292, %295 : vector<1x128xi32>
      %c2_i32_93 = arith.constant 2 : i32
      %297 = vector.broadcast %c2_i32_93 : i32 to vector<1x128xi32>
      %298 = arith.cmpi eq, %292, %297 : vector<1x128xi32>
      %c3_i32_94 = arith.constant 3 : i32
      %299 = vector.broadcast %c3_i32_94 : i32 to vector<1x128xi32>
      %300 = arith.cmpi eq, %292, %299 : vector<1x128xi32>
      %c4_i32 = arith.constant 4 : i32
      %301 = vector.broadcast %c4_i32 : i32 to vector<1x128xi32>
      %302 = arith.cmpi eq, %292, %301 : vector<1x128xi32>
      %c0_i32_95 = arith.constant 0 : i32
      %303 = vector.broadcast %291 : i32 to vector<1x128xi32>
      %304 = vector.broadcast %c0_i32_95 : i32 to vector<1x128xi32>
      %305 = arith.select %302, %303, %304 : vector<1x128xi1>, vector<1x128xi32>
      %306 = vector.broadcast %268 : i32 to vector<1x128xi32>
      %307 = arith.select %300, %306, %305 : vector<1x128xi1>, vector<1x128xi32>
      %308 = vector.broadcast %252 : i32 to vector<1x128xi32>
      %309 = arith.select %298, %308, %307 : vector<1x128xi1>, vector<1x128xi32>
      %310 = vector.broadcast %236 : i32 to vector<1x128xi32>
      %311 = arith.select %296, %310, %309 : vector<1x128xi1>, vector<1x128xi32>
      %312 = vector.broadcast %220 : i32 to vector<1x128xi32>
      %313 = arith.select %294, %312, %311 : vector<1x128xi1>, vector<1x128xi32>
      %c0_96 = arith.constant 0 : index
      %c0_97 = arith.constant 0 : index
      %314 = vector.load %arg2[%c0_96, %c0_97] : memref<1x128xi32, #tpu.memory_space<vmem>>, vector<1x128xi32>
      tpu.vector_store %arg2[%c0_96, %c0_97], %313 {strides = array<i32>} : memref<1x128xi32, #tpu.memory_space<vmem>>, vector<1x128xi32>,
    } else {
    }
    return
  }
  func.func @transform_0(%arg0: i32) -> (i32, i32) {
    %c0_i32 = arith.constant 0 : i32
    %c0_i32_0 = arith.constant 0 : i32
    return %arg0, %c0_i32 : i32, i32
  }
  func.func @transform_1(%arg0: i32) -> (i32, i32) {
    %c0_i32 = arith.constant 0 : i32
    %c0_i32_0 = arith.constant 0 : i32
    %c0_i32_1 = arith.constant 0 : i32
    return %c0_i32, %c0_i32_0 : i32, i32
  }
}

</mosaic_0001>

<llo_original>
// kernel: tpu_custom_call.1
$region0: #{tpu_custom_call.1}
  #allocation0 [shape = 'u32[]', space=smem, size = 0x4, offset = 0x4, fixed_abs, tag = 'smem constant byte address 0x4 - core index']
  #allocation1 [shape = 'u32[144,128]{1,0:T(1,128)}', space=vmem, size = 0x12000, scoped, tag = 'internal scratch']
  #allocation2 [shape = 's32[8,128]{1,0:T(8,128)}', space=vmem, size = 0x1000, scoped, tag = 'scratch operand']
  #allocation3 [shape = 's32[8,128]{1,0:T(8,128)}', space=vmem, size = 0x1000, scoped, tag = 'scratch operand']
  #allocation4 [shape = 's32[8,128]{1,0:T(8,128)}', space=vmem, size = 0x1000, scoped, tag = 'scratch operand']
  #allocation5 [shape = 's32[8,128]{1,0:T(8,128)}', space=vmem, size = 0x1000, scoped, tag = 'scratch operand']
  #allocation6 [shape = 's32[8,128]{1,0:T(8,128)}', space=vmem, size = 0x1000, scoped, tag = 'scratch operand']
  #allocation7 [shape = 's32[8,128]{1,0:T(8,128)}', space=vmem, size = 0x1000, scoped, tag = 'scratch operand']
  %s0 = inlined_call_operand.hbm [shape: s32[8,128], index: 0, kind: input, shape index: {}]
  %s1 = inlined_call_operand.hbm [shape: s32[1,128], index: 1, kind: output, shape index: {}]
  %s2 = sld [smem:[#allocation0]]
  $region34: #{tpu_custom_call.1} parent=0
    _
  %s4 = ssub.s32 1, %s2
  %s5 = scalar_select 0, %s4, %s2
  $region1: #{tpu_custom_call.1} parent=0
    #allocation8 [shape = 'u8[4096]{0}', space=vmem, size = 0x1000, scoped, tag = 'input window, operand 0, single buffered']
    #allocation9 [shape = 's32[1]{0}', space=sflag, size = 0x4, scoped, tag = 'scoped memory for tpu_custom_call.1']
    #allocation10 [shape = 's32[1]{0}', space=sflag, size = 0x4, scoped, tag = 'scoped memory for tpu_custom_call.1']
    #allocation11 [shape = 'u8[512]{0}', space=vmem, size = 0x400, scoped, tag = 'output window, operand 0, single buffered']
    %6 = vsyncpa [#allocation9], 0
    %7 = vsyncpa [#allocation10], 0
    // Predicated region
    $region2: #{tpu_custom_call.1} parent=1 // pred_check
      _
    $region3: #{tpu_custom_call.1} parent=1 // pred_check_branch
      %9 = sbr.rel (0) target = $region5
    $region4: #{tpu_custom_call.1} parent=1 // pred_region
      %s11 = ssub.s32 128, 128
      %12 = vsyncadd [#allocation9], %s11
      %s14 = sshll.u32 [#allocation8], 4
      %s15 = int_to_ptr.vmem [resolvable:$true] %s14
      %17 = dma.hbm_to_vmem [thread:$0]  %s0, 128, %s15, [#allocation9]
    $region5: #{tpu_custom_call.1} parent=1 // pred_fallthru
      _
    // Predicated region
    $region6: #{tpu_custom_call.1} parent=1 // pred_check
      _
    $region7: #{tpu_custom_call.1} parent=1 // pred_check_branch
      %19 = sbr.rel (0) target = $region9
    $region8: #{tpu_custom_call.1} parent=1 // pred_region
      %20 = dma.done [#allocation9], 128
    $region9: #{tpu_custom_call.1} parent=1 // pred_fallthru
      _
    %p21 = scmp.eq.s32.totalorder 0, 0
    // Predicated region
    $region10: #{tpu_custom_call.1} parent=1 // pred_check
      %p22 = pneg %p21
    $region11: #{tpu_custom_call.1} parent=1 // pred_check_branch
      %24 = sbr.rel (%p22) target = $region13
    $region12: #{tpu_custom_call.1} parent=1 // pred_region
      %25 = vst [vmem:[#allocation2] sm:$0xff] 0
      %26 = vst [vmem:[#allocation3] sm:$0xff] 0
      %27 = vst [vmem:[#allocation4] sm:$0xff] 0
      %28 = vst [vmem:[#allocation5] sm:$0xff] 0
      %29 = vst [vmem:[#allocation6] sm:$0xff] 2147483648
      %30 = vst [vmem:[#allocation7] sm:$0xff] 2147483647
      %31 = vst [vmem:[#allocation11] sm:$0x1] 0
    $region13: #{tpu_custom_call.1} parent=1 // pred_fallthru
      _
    %v32 = vld [vmem:[#allocation8] sm:$0xff]
    %v33 = vshra.s32 %v32, 7
    %v34 = vcvt.s32.f32 %v33
    %v35 = vmul.f32 %v34, 0.0014814815
    %v36 = vcvt.f32.s32.to.zero.pseudo %v35
    %v37 = vmul.u32 %v36, 675
    %v38 = vsub.s32 %v33, %v37
    %vm39 = vcmp.ge.s32.totalorder %v38, 675
    %v40 = vsel %vm39, 1, 0
    %v41 = vadd.s32 %v36, %v40
    %vm42 = vcmp.lt.s32.totalorder %v38, 0
    %v43 = vsel %vm42, 1, 0
    %v44 = vsub.s32 %v41, %v43
    %v45 = vadd.s32 %v44, 719468
    %v46 = vcvt.s32.f32 %v45
    %v47 = vmul.f32 %v46, 6.8447675e-06
    %v48 = vcvt.f32.s32.to.zero.pseudo %v47
    %v49 = vmul.u32 %v48, 146097
    %v50 = vsub.s32 %v45, %v49
    %vm51 = vcmp.ge.s32.totalorder %v50, 146097
    %v52 = vsel %vm51, 1, 0
    %v53 = vadd.s32 %v48, %v52
    %vm54 = vcmp.lt.s32.totalorder %v50, 0
    %v55 = vsel %vm54, 1, 0
    %v56 = vsub.s32 %v53, %v55
    %v57 = vmul.u32 %v56, 146097
    %v58 = vsub.s32 %v45, %v57
    %v59 = vcvt.s32.f32 %v58
    %v60 = vmul.f32 %v59, 0.0006849315
    %v61 = vcvt.f32.s32.to.zero.pseudo %v60
    %v62 = vmul.u32 %v61, 1460
    %v63 = vsub.s32 %v58, %v62
    %vm64 = vcmp.ge.s32.totalorder %v63, 1460
    %v65 = vsel %vm64, 1, 0
    %v66 = vadd.s32 %v61, %v65
    %vm67 = vcmp.lt.s32.totalorder %v63, 0
    %v68 = vsel %vm67, 1, 0
    %v69 = vsub.s32 %v66, %v68
    %v70 = vsub.s32 %v58, %v69
    %v71 = vmul.f32 %v59, 2.7379258e-05
    %v72 = vcvt.f32.s32.to.zero.pseudo %v71
    %v73 = vmul.u32 %v72, 36524
    %v74 = vsub.s32 %v58, %v73
    %vm75 = vcmp.ge.s32.totalorder %v74, 36524
    %v76 = vsel %vm75, 1, 0
    %v77 = vadd.s32 %v72, %v76
    %vm78 = vcmp.lt.s32.totalorder %v74, 0
    %v79 = vsel %vm78, 1, 0
    %v80 = vsub.s32 %v77, %v79
    %v81 = vadd.s32 %v70, %v80
    %vm82 = vcmp.eq.s32.totalorder %v58, 146096
    %v83 = vsel %vm82, 1, 0
    %v84 = vsub.s32 %v81, %v83
    %v85 = vcvt.s32.f32 %v84
    %v86 = vmul.f32 %v85, 0.002739726
    %v87 = vcvt.f32.s32.to.zero.pseudo %v86
    %v88 = vmul.u32 %v87, 365
    %v89 = vsub.s32 %v84, %v88
    %vm90 = vcmp.ge.s32.totalorder %v89, 365
    %v91 = vsel %vm90, 1, 0
    %v92 = vadd.s32 %v87, %v91
    %vm93 = vcmp.lt.s32.totalorder %v89, 0
    %v94 = vsel %vm93, 1, 0
    %v95 = vsub.s32 %v92, %v94
    %v96 = vmul.u32 %v56, 400
    %v97 = vadd.s32 %v95, %v96
    %v98 = vmul.u32 %v95, 365
    %v99 = vshra.s32 %v95, 2
    %v100 = vadd.s32 %v98, %v99
    %v101 = vcvt.s32.f32 %v95
    %v102 = vmul.f32 %v101, 0.01
    %v103 = vcvt.f32.s32.to.zero.pseudo %v102
    %v104 = vmul.u32 %v103, 100
    %v105 = vsub.s32 %v95, %v104
    %vm106 = vcmp.ge.s32.totalorder %v105, 100
    %v107 = vsel %vm106, 1, 0
    %v108 = vadd.s32 %v103, %v107
    %vm109 = vcmp.lt.s32.totalorder %v105, 0
    %v110 = vsel %vm109, 1, 0
    %v111 = vsub.s32 %v108, %v110
    %v112 = vsub.s32 %v100, %v111
    %v113 = vsub.s32 %v58, %v112
    %v114 = vmul.u32 %v113, 5
    %v115 = vadd.s32 %v114, 2
    %v116 = vcvt.s32.f32 %v115
    %v117 = vmul.f32 %v116, 0.006535948
    %v118 = vcvt.f32.s32.to.zero.pseudo %v117
    %v119 = vmul.u32 %v118, 153
    %v120 = vsub.s32 %v115, %v119
    %vm121 = vcmp.ge.s32.totalorder %v120, 153
    %v122 = vsel %vm121, 1, 0
    %v123 = vadd.s32 %v118, %v122
    %vm124 = vcmp.lt.s32.totalorder %v120, 0
    %v125 = vsel %vm124, 1, 0
    %v126 = vsub.s32 %v123, %v125
    %v127 = vmul.u32 %v126, 153
    %v128 = vadd.s32 %v127, 2
    %v129 = vcvt.s32.f32 %v128
    %v130 = vmul.f32 %v129, 0.2
    %v131 = vcvt.f32.s32.to.zero.pseudo %v130
    %v132 = vmul.u32 %v131, 5
    %v133 = vsub.s32 %v128, %v132
    %vm134 = vcmp.ge.s32.totalorder %v133, 5
    %v135 = vsel %vm134, 1, 0
    %v136 = vadd.s32 %v131, %v135
    %vm137 = vcmp.lt.s32.totalorder %v133, 0
    %v138 = vsel %vm137, 1, 0
    %v139 = vsub.s32 %v136, %v138
    %v140 = vsub.s32 %v113, %v139
    %v141 = vadd.s32 %v140, 1
    %vm142 = vcmp.lt.s32.totalorder %v126, 10
    %v143 = vsel %vm142, 3, 4294967287
    %v144 = vadd.s32 %v126, %v143
    %vm145 = vcmp.le.s32.totalorder %v144, 2
    %v146 = vsel %vm145, 1, 0
    %v147 = vadd.s32 %v97, %v146
    %v148 = vsub.s32 %v147, 1970
    %v149 = vadd.s32 %v44, 3
    %v150 = vcvt.s32.f32 %v149
    %v151 = vmul.f32 %v150, 0.14285715
    %v152 = vcvt.f32.s32.to.zero.pseudo %v151
    %v153 = vmul.u32 %v152, 7
    %v154 = vsub.s32 %v149, %v153
    %vm155 = vcmp.ge.s32.totalorder %v154, 7
    %v156 = vsel %vm155, 1, 0
    %v157 = vadd.s32 %v152, %v156
    %vm158 = vcmp.lt.s32.totalorder %v154, 0
    %v159 = vsel %vm158, 1, 0
    %v160 = vsub.s32 %v157, %v159
    %v161 = vmul.u32 %v160, 7
    %v162 = vsub.s32 %v149, %v161
    %p163 = scmp.ne.s32.totalorder 0, 0
    // Predicated region
    $region14: #{tpu_custom_call.1} parent=1 // pred_check
      %p164 = pneg %p163
    $region15: #{tpu_custom_call.1} parent=1 // pred_check_branch
      %166 = sbr.rel (%p164) target = $region17
    $region16: #{tpu_custom_call.1} parent=1 // pred_region
      %v167 = vld [vmem:[#allocation2] sm:$0xff]
      %v168 = vadd.s32 %v167, %v148
      %169 = vst [vmem:[#allocation2] sm:$0xff] %v168
      %v170 = vld [vmem:[#allocation3] sm:$0xff]
      %v171 = vadd.s32 %v170, %v144
      %172 = vst [vmem:[#allocation3] sm:$0xff] %v171
      %v173 = vld [vmem:[#allocation4] sm:$0xff]
      %v174 = vadd.s32 %v173, %v141
      %175 = vst [vmem:[#allocation4] sm:$0xff] %v174
      %v176 = vld [vmem:[#allocation5] sm:$0xff]
      %v177 = vadd.s32 %v176, %v162
      %178 = vst [vmem:[#allocation5] sm:$0xff] %v177
    $region17: #{tpu_custom_call.1} parent=1 // pred_fallthru
      _
    // Predicated region
    $region18: #{tpu_custom_call.1} parent=1 // pred_check
      %p179 = pneg %p21
    $region19: #{tpu_custom_call.1} parent=1 // pred_check_branch
      %181 = sbr.rel (%p179) target = $region21
    $region20: #{tpu_custom_call.1} parent=1 // pred_region
      %v182 = vlaneseq
      %v183 = vshrl.u32 %v182, 7
      %v184 = vlaneseq
      %v185 = vand.u32 %v184, 127
      %v186 = vmul.u32 %v183, 128
      %v187 = vadd.s32 %v186, %v185
      %vm188 = vcmp.lt.s32.totalorder %v187, 8
      %v189 = vsel %vm188, 1, 0
      %v190 = vmul.u32 %v148, %v189
      %v191 = vmul.u32 %v144, %v189
      %v192 = vmul.u32 %v141, %v189
      %v193 = vmul.u32 %v162, %v189
      %v194 = vld [vmem:[#allocation2] sm:$0xff]
      %v195 = vadd.s32 %v194, %v190
      %196 = vst [vmem:[#allocation2] sm:$0xff] %v195
      %v197 = vld [vmem:[#allocation3] sm:$0xff]
      %v198 = vadd.s32 %v197, %v191
      %199 = vst [vmem:[#allocation3] sm:$0xff] %v198
      %v200 = vld [vmem:[#allocation4] sm:$0xff]
      %v201 = vadd.s32 %v200, %v192
      %202 = vst [vmem:[#allocation4] sm:$0xff] %v201
      %v203 = vld [vmem:[#allocation5] sm:$0xff]
      %v204 = vadd.s32 %v203, %v193
      %205 = vst [vmem:[#allocation5] sm:$0xff] %v204
    $region21: #{tpu_custom_call.1} parent=1 // pred_fallthru
      _
    %v206 = vld [vmem:[#allocation6] sm:$0xff]
    %vm207 = vcmp.gt.s32.totalorder %v206, %v32
    %v208 = vsel %vm207, %v206, %v32
    %209 = vst [vmem:[#allocation6] sm:$0xff] %v208
    %v210 = vld [vmem:[#allocation7] sm:$0xff]
    %vm211 = vcmp.lt.s32.totalorder %v210, %v32
    %v212 = vsel %vm211, %v210, %v32
    %213 = vst [vmem:[#allocation7] sm:$0xff] %v212
    // Predicated region
    $region22: #{tpu_custom_call.1} parent=1 // pred_check
      %p214 = pneg %p21
    $region23: #{tpu_custom_call.1} parent=1 // pred_check_branch
      %216 = sbr.rel (%p214) target = $region25
    $region24: #{tpu_custom_call.1} parent=1 // pred_region
      %v217 = vld [vmem:[#allocation2] sm:$0xff]
      %v218 = vand.u32 %v217, 65535
      %v219 = vshrl.u32 %v217, 16
      %v220 = vcvt.s32.f32 %v218
      %v221 = vcvt.s32.f32 %v219
      %222 = vadd.xlane.f32.xlu0 %v220
      %v223 = vpop.xlane.xlu0 %222
      %224 = vadd.xlane.f32.xlu0 %v221
      %v225 = vpop.xlane.xlu0 %224
      %v226 = vcvt.f32.s32 %v223
      %v227 = vcvt.f32.s32 %v225
      %v228 = vshll.u32 %v227, 16
      %v229 = vadd.s32 %v228, %v226
      %v230 = vrot.slane %v229, 4
      %v231 = vadd.s32 %v229, %v230
      %v232 = vrot.slane %v231, 2
      %v233 = vadd.s32 %v231, %v232
      %v234 = vrot.slane %v233, 1
      %v235 = vadd.s32 %v233, %v234
      %s236 = vtos %v235
      %s237 = scvt.s32.f32 %s236
      %s238 = smul.f32 %s237, 0.125
      %s239 = scvt.f32.s32.to.zero.pseudo %s238
      %s240 = smul.u32 %s239, 8
      %s241 = ssub.s32 %s236, %s240
      %p242 = scmp.ge.s32.totalorder %s241, 8
      %s243 = scalar_select %p242, 1, 0
      %s244 = sadd.s32 %s239, %s243
      %p245 = scmp.lt.s32.totalorder %s241, 0
      %s246 = scalar_select %p245, 1, 0
      %s247 = ssub.s32 %s244, %s246
      %s248 = sadd.s32 %s247, 1970
      %v249 = vld [vmem:[#allocation3] sm:$0xff]
      %v250 = vand.u32 %v249, 65535
      %v251 = vshrl.u32 %v249, 16
      %v252 = vcvt.s32.f32 %v250
      %v253 = vcvt.s32.f32 %v251
      %254 = vadd.xlane.f32.xlu0 %v252
      %v255 = vpop.xlane.xlu0 %254
      %256 = vadd.xlane.f32.xlu0 %v253
      %v257 = vpop.xlane.xlu0 %256
      %v258 = vcvt.f32.s32 %v255
      %v259 = vcvt.f32.s32 %v257
      %v260 = vshll.u32 %v259, 16
      %v261 = vadd.s32 %v260, %v258
      %v262 = vrot.slane %v261, 4
      %v263 = vadd.s32 %v261, %v262
      %v264 = vrot.slane %v263, 2
      %v265 = vadd.s32 %v263, %v264
      %v266 = vrot.slane %v265, 1
      %v267 = vadd.s32 %v265, %v266
      %s268 = vtos %v267
      %s269 = scvt.s32.f32 %s268
      %s270 = smul.f32 %s269, 0.125
      %s271 = scvt.f32.s32.to.zero.pseudo %s270
      %s272 = smul.u32 %s271, 8
      %s273 = ssub.s32 %s268, %s272
      %p274 = scmp.ge.s32.totalorder %s273, 8
      %s275 = scalar_select %p274, 1, 0
      %s276 = sadd.s32 %s271, %s275
      %p277 = scmp.lt.s32.totalorder %s273, 0
      %s278 = scalar_select %p277, 1, 0
      %s279 = ssub.s32 %s276, %s278
      %v280 = vld [vmem:[#allocation4] sm:$0xff]
      %v281 = vand.u32 %v280, 65535
      %v282 = vshrl.u32 %v280, 16
      %v283 = vcvt.s32.f32 %v281
      %v284 = vcvt.s32.f32 %v282
      %285 = vadd.xlane.f32.xlu0 %v283
      %v286 = vpop.xlane.xlu0 %285
      %287 = vadd.xlane.f32.xlu0 %v284
      %v288 = vpop.xlane.xlu0 %287
      %v289 = vcvt.f32.s32 %v286
      %v290 = vcvt.f32.s32 %v288
      %v291 = vshll.u32 %v290, 16
      %v292 = vadd.s32 %v291, %v289
      %v293 = vrot.slane %v292, 4
      %v294 = vadd.s32 %v292, %v293
      %v295 = vrot.slane %v294, 2
      %v296 = vadd.s32 %v294, %v295
      %v297 = vrot.slane %v296, 1
      %v298 = vadd.s32 %v296, %v297
      %s299 = vtos %v298
      %s300 = scvt.s32.f32 %s299
      %s301 = smul.f32 %s300, 0.125
      %s302 = scvt.f32.s32.to.zero.pseudo %s301
      %s303 = smul.u32 %s302, 8
      %s304 = ssub.s32 %s299, %s303
      %p305 = scmp.ge.s32.totalorder %s304, 8
      %s306 = scalar_select %p305, 1, 0
      %s307 = sadd.s32 %s302, %s306
      %p308 = scmp.lt.s32.totalorder %s304, 0
      %s309 = scalar_select %p308, 1, 0
      %s310 = ssub.s32 %s307, %s309
      %v311 = vld [vmem:[#allocation5] sm:$0xff]
      %v312 = vand.u32 %v311, 65535
      %v313 = vshrl.u32 %v311, 16
      %v314 = vcvt.s32.f32 %v312
      %v315 = vcvt.s32.f32 %v313
      %316 = vadd.xlane.f32.xlu0 %v314
      %v317 = vpop.xlane.xlu0 %316
      %318 = vadd.xlane.f32.xlu0 %v315
      %v319 = vpop.xlane.xlu0 %318
      %v320 = vcvt.f32.s32 %v317
      %v321 = vcvt.f32.s32 %v319
      %v322 = vshll.u32 %v321, 16
      %v323 = vadd.s32 %v322, %v320
      %v324 = vrot.slane %v323, 4
      %v325 = vadd.s32 %v323, %v324
      %v326 = vrot.slane %v325, 2
      %v327 = vadd.s32 %v325, %v326
      %v328 = vrot.slane %v327, 1
      %v329 = vadd.s32 %v327, %v328
      %s330 = vtos %v329
      %s331 = scvt.s32.f32 %s330
      %s332 = smul.f32 %s331, 0.125
      %s333 = scvt.f32.s32.to.zero.pseudo %s332
      %s334 = smul.u32 %s333, 8
      %s335 = ssub.s32 %s330, %s334
      %p336 = scmp.ge.s32.totalorder %s335, 8
      %s337 = scalar_select %p336, 1, 0
      %s338 = sadd.s32 %s333, %s337
      %p339 = scmp.lt.s32.totalorder %s335, 0
      %s340 = scalar_select %p339, 1, 0
      %s341 = ssub.s32 %s338, %s340
      %v342 = vld [vmem:[#allocation6] sm:$0xff]
      %v343 = vand.u32 %v342, 65535
      %v344 = vshra.s32 %v342, 16
      %v345 = vcvt.s32.f32 %v343
      %v346 = vcvt.s32.f32 %v344
      %347 = vmax.xlane.f32.xlu0 %v346
      %v348 = vpop.xlane.xlu0 %347
      %vm349 = vcmp.eq.f32.partialorder %v346, %v348
      %v350 = vsel %vm349, %v345, -inf
      %351 = vmax.xlane.f32.xlu0 %v350
      %v352 = vpop.xlane.xlu0 %351
      %v353 = vcvt.f32.s32 %v352
      %v354 = vcvt.f32.s32 %v348
      %v355 = vshll.u32 %v354, 16
      %v356 = vadd.s32 %v355, %v353
      %v357 = vrot.slane %v356, 4
      %vm358 = vcmp.gt.s32.totalorder %v356, %v357
      %v359 = vsel %vm358, %v356, %v357
      %v360 = vrot.slane %v359, 2
      %vm361 = vcmp.gt.s32.totalorder %v359, %v360
      %v362 = vsel %vm361, %v359, %v360
      %v363 = vrot.slane %v362, 1
      %vm364 = vcmp.gt.s32.totalorder %v362, %v363
      %v365 = vsel %vm364, %v362, %v363
      %s366 = vtos %v365
      %v367 = vld [vmem:[#allocation7] sm:$0xff]
      %v368 = vand.u32 %v367, 65535
      %v369 = vshra.s32 %v367, 16
      %v370 = vcvt.s32.f32 %v368
      %v371 = vcvt.s32.f32 %v369
      %372 = vmin.xlane.f32.xlu0 %v371
      %v373 = vpop.xlane.xlu0 %372
      %vm374 = vcmp.eq.f32.partialorder %v371, %v373
      %v375 = vsel %vm374, %v370, inf
      %376 = vmin.xlane.f32.xlu0 %v375
      %v377 = vpop.xlane.xlu0 %376
      %v378 = vcvt.f32.s32 %v377
      %v379 = vcvt.f32.s32 %v373
      %v380 = vshll.u32 %v379, 16
      %v381 = vadd.s32 %v380, %v378
      %v382 = vrot.slane %v381, 4
      %vm383 = vcmp.lt.s32.totalorder %v381, %v382
      %v384 = vsel %vm383, %v381, %v382
      %v385 = vrot.slane %v384, 2
      %vm386 = vcmp.lt.s32.totalorder %v384, %v385
      %v387 = vsel %vm386, %v384, %v385
      %v388 = vrot.slane %v387, 1
      %vm389 = vcmp.lt.s32.totalorder %v387, %v388
      %v390 = vsel %vm389, %v387, %v388
      %s391 = vtos %v390
      %s392 = ssub.s32 %s366, %s391
      %s393 = sshra.s32 %s392, 7
      %s394 = scvt.s32.f32 %s393
      %s395 = smul.f32 %s394, 0.0014814815
      %s396 = scvt.f32.s32.to.zero.pseudo %s395
      %s397 = smul.u32 %s396, 675
      %s398 = ssub.s32 %s393, %s397
      %p399 = scmp.ge.s32.totalorder %s398, 675
      %s400 = scalar_select %p399, 1, 0
      %s401 = sadd.s32 %s396, %s400
      %p402 = scmp.lt.s32.totalorder %s398, 0
      %s403 = scalar_select %p402, 1, 0
      %s404 = ssub.s32 %s401, %s403
      %v405 = vlaneseq
      %v406 = vand.u32 %v405, 127
      %vm407 = vcmp.eq.s32.totalorder %v406, 0
      %vm408 = vcmp.eq.s32.totalorder %v406, 1
      %vm409 = vcmp.eq.s32.totalorder %v406, 2
      %vm410 = vcmp.eq.s32.totalorder %v406, 3
      %vm411 = vcmp.eq.s32.totalorder %v406, 4
      %v412 = vstv %s404
      %v413 = vsel %vm411, %v412, 0
      %v414 = vstv %s341
      %v415 = vsel %vm410, %v414, %v413
      %v416 = vstv %s310
      %v417 = vsel %vm409, %v416, %v415
      %v418 = vstv %s279
      %v419 = vsel %vm408, %v418, %v417
      %v420 = vstv %s248
      %v421 = vsel %vm407, %v420, %v419
      %422 = vst [vmem:[#allocation11] sm:$0x1] %v421
    $region25: #{tpu_custom_call.1} parent=1 // pred_fallthru
      _
    // Predicated region
    $region26: #{tpu_custom_call.1} parent=1 // pred_check
      _
    $region27: #{tpu_custom_call.1} parent=1 // pred_check_branch
      %424 = sbr.rel (0) target = $region29
    $region28: #{tpu_custom_call.1} parent=1 // pred_region
      %s426 = ssub.s32 16, 16
      %427 = vsyncadd [#allocation10], %s426
      %s429 = sshll.u32 [#allocation11], 4
      %s430 = int_to_ptr.vmem [resolvable:$true] %s429
      %432 = dma.vmem_to_hbm [thread:$0]  %s430, 16, %s1, [#allocation10]
    $region29: #{tpu_custom_call.1} parent=1 // pred_fallthru
      _
    // Predicated region
    $region30: #{tpu_custom_call.1} parent=1 // pred_check
      _
    $region31: #{tpu_custom_call.1} parent=1 // pred_check_branch
      %434 = sbr.rel (0) target = $region33
    $region32: #{tpu_custom_call.1} parent=1 // pred_region
      %435 = dma.done [#allocation10], 16
    $region33: #{tpu_custom_call.1} parent=1 // pred_fallthru
      _
    %436 = vsyncpa [#allocation9], 1
    %437 = vsyncpa [#allocation10], 1

</llo_original>
